<compile_context>
chip_gen: v7x
topology: tpu7x:2x2x1
jax: 0.10.0
libtpu: 0.0.40
codegen_flags: <defaults>
</compile_context>

<pallas_src>
import math

import jax
import jax.numpy as jnp
from jax.experimental import pallas as pl
from jax.experimental.pallas import tpu as pltpu


def rope_kernel(x_ref, cos_ref, sin_even_ref, sin_odd_ref, o_ref):
    # x_ref / o_ref: (bh_tile, lane_w); table refs: (1, lane_w) broadcast over rows.
    x = x_ref[...]
    n = x.shape[-1]
    # left[j]  = x[j+1]  (wrap at j = n-1, an odd flat lane -> sin_even there is 0)
    # right[j] = x[j-1]  (wrap at j = 0,   an even flat lane -> sin_odd  there is 0)
    left = pltpu.roll(x, shift=n - 1, axis=1)
    right = pltpu.roll(x, shift=1, axis=1)
    out = x * cos_ref[...] + left * sin_even_ref[...] + right * sin_odd_ref[...]
    o_ref[...] = out.astype(o_ref.dtype)


def make_rope_tables(max_seq_len: int, d_head: int, theta: float):
    # Same math as RoPE._pre_cal (repeat_interleave(2, -1) tables).
    pos = jnp.arange(max_seq_len, dtype=jnp.float32)[:, None]          # (L, 1)
    i = jnp.arange(d_head // 2, dtype=jnp.float32)                     # (D/2,)
    omega = jnp.exp(-2.0 * i / d_head * math.log(theta))               # (D/2,)
    rope_sin = jnp.repeat(jnp.sin(pos * omega), 2, axis=-1)            # (L, D)
    rope_cos = jnp.repeat(jnp.cos(pos * omega), 2, axis=-1)            # (L, D)
    return rope_sin, rope_cos


def prepare_rope_tables(rope_sin, rope_cos, seq_len: int, d_head: int,
                        compute_dtype=jnp.float32):
    """One-time precompute (hoisted out of the per-call path): flattened
    (1, S*D) cos table and two parity-folded/signed sin tables."""
    sd = seq_len * d_head
    cos = rope_cos[:seq_len, :].reshape(1, sd).astype(jnp.float32)
    sin = rope_sin[:seq_len, :].reshape(1, sd).astype(jnp.float32)
    even = (jnp.arange(sd) % 2 == 0).reshape(1, sd)
    sin_even = jnp.where(even, sin, 0.0)    # multiplies left-neighbor on even lanes
    sin_odd = jnp.where(even, 0.0, -sin)    # multiplies right-neighbor on odd lanes
    return (cos.astype(compute_dtype),
            sin_even.astype(compute_dtype),
            sin_odd.astype(compute_dtype))


def _divisors(n: int):
    return [d for d in range(1, n + 1) if n % d == 0]


def _pick_tiles(bh: int, s: int, d: int, itemsize: int, target_bytes: int = 4 << 20):
    """Pick (bh_tile, s_tile) so that:
      * s_tile*D is a multiple of 128 (or the full lane extent),
      * bh_tile is a multiple of the dtype's min sublane tile (8*4/itemsize)
        or the full extent,
      * one block is ~target_bytes, and there are >= 2 grid blocks when
        possible (so both v7x TensorCores get fed)."""
    min_sub = max(8 * 4 // max(1, itemsize), 1)   # 8 rows f32, 16 bf16, 32 int8

    lane_cands = [st for st in _divisors(s) if (st * d) % 128 == 0]
    if s not in lane_cands:
        lane_cands.append(s)                       # full extent always legal
    fitting = [st for st in lane_cands if min_sub * st * d * itemsize <= target_bytes]
    s_tile = max(fitting) if fitting else min(lane_cands)
    lane_w = s_tile * d

    row_cands = [r for r in _divisors(bh) if r % min_sub == 0]
    if bh not in row_cands:
        row_cands.append(bh)                       # full extent always legal
    row_fitting = [r for r in row_cands if r * lane_w * itemsize <= target_bytes]
    if not row_fitting:
        row_fitting = [min(row_cands)]
    multi = [r for r in row_fitting if (bh // r) * (s // s_tile) >= 2]
    bh_tile = max(multi) if multi else max(row_fitting)
    return bh_tile, s_tile


def _vmem_limit_bytes(default: int = 32 << 20) -> int:
    # ~64 MiB on v5e/v6e (128 MiB physical VMEM), ~48 MiB on v7x (64 MiB).
    try:
        cap = pltpu.get_tpu_info().vmem_capacity_bytes
        return int(min(cap * 3 // 4, 64 << 20))
    except Exception:
        return default


def rope_forward(x, cos_flat, sin_even_flat, sin_odd_flat):
    """x: (B, H, S, D) -> (B, H, S, D), dense path of RoPE.forward.
    cos_flat / sin_even_flat / sin_odd_flat: precomputed (1, S*D) tables from
    prepare_rope_tables."""
    B, H, S, D = x.shape
    assert D % 2 == 0, "d_head must be even for RoPE"
    BH, SD = B * H, S * D
    assert cos_flat.shape == (1, SD), "tables must be prepared for this seq_len/d_head"

    # Lane-dense layout: flatten (S, D) onto the lane axis.
    x2 = x.reshape(BH, SD)

    bh_tile, s_tile = _pick_tiles(BH, S, D, jnp.dtype(x.dtype).itemsize)
    lane_w = s_tile * D
    grid = (BH // bh_tile, S // s_tile)

    out = pl.pallas_call(
        rope_kernel,
        out_shape=jax.ShapeDtypeStruct((BH, SD), x.dtype),
        grid=grid,
        in_specs=[
            pl.BlockSpec((bh_tile, lane_w), lambda i, j: (i, j)),
            pl.BlockSpec((1, lane_w), lambda i, j: (0, j)),
            pl.BlockSpec((1, lane_w), lambda i, j: (0, j)),
            pl.BlockSpec((1, lane_w), lambda i, j: (0, j)),
        ],
        out_specs=pl.BlockSpec((bh_tile, lane_w), lambda i, j: (i, j)),
        compiler_params=pltpu.CompilerParams(
            dimension_semantics=("parallel", "parallel"),
            vmem_limit_bytes=_vmem_limit_bytes(),
        ),
    )(x2, cos_flat, sin_even_flat, sin_odd_flat)
    return out.reshape(B, H, S, D)


def rope_reference(x, rope_sin, rope_cos):
    # Pure-JAX reference matching the PyTorch forward exactly.
    S = x.shape[-2]
    rot = jnp.stack([x[..., 1::2], -x[..., 0::2]], axis=-1).reshape(x.shape)
    return x * rope_cos[:S, :] + rot * rope_sin[:S, :]


if __name__ == "__main__":
    # Small config consistent with MiniKLConfig: d_model=256, num_heads=8 -> d_head=32
    max_seq_len = 64
    d_head = 32
    theta = 1_000_000.0
    B, H, S = 2, 8, 16

    key = jax.random.PRNGKey(0)
    x = jax.random.normal(key, (B, H, S, d_head), dtype=jnp.float32)

    rope_sin, rope_cos = make_rope_tables(max_seq_len, d_head, theta)
    # One-time (hoisted) table precompute; compute dtype follows the input.
    cos_flat, sin_even_flat, sin_odd_flat = prepare_rope_tables(
        rope_sin, rope_cos, S, d_head, compute_dtype=x.dtype)

    out = rope_forward(x, cos_flat, sin_even_flat, sin_odd_flat)
    out = jax.block_until_ready(out)

    ref = rope_reference(x, rope_sin, rope_cos)
    assert out.shape == ref.shape and out.dtype == ref.dtype
    assert jnp.allclose(out, ref, atol=1e-5, rtol=1e-5), "mismatch vs reference"

    print("KERNEL_OK")
</pallas_src>

<mosaic_0001>
module attributes {stable_mosaic.version = 11 : i64} {
  func.func @rope_kernel(%arg0: i32, %arg1: i32, %arg2: memref<8x512xf32, #tpu.memory_space<vmem>>, %arg3: memref<1x512xf32, #tpu.memory_space<vmem>>, %arg4: memref<1x512xf32, #tpu.memory_space<vmem>>, %arg5: memref<1x512xf32, #tpu.memory_space<vmem>>, %arg6: memref<8x512xf32, #tpu.memory_space<vmem>>) attributes {dimension_semantics = [#tpu.dimension_semantics<parallel>, #tpu.dimension_semantics<parallel>], iteration_bounds = array<i64: 2, 1>, scalar_prefetch = 0 : i64, scratch_operands = 0 : i64, tpu.core_type = #tpu.core_type<tc>, window_params = [{transform_indices = @transform_0, window_bounds = array<i64: 8, 512>}, {transform_indices = @transform_1, window_bounds = array<i64: 1, 512>}, {transform_indices = @transform_2, window_bounds = array<i64: 1, 512>}, {transform_indices = @transform_3, window_bounds = array<i64: 1, 512>}, {transform_indices = @transform_4, window_bounds = array<i64: 8, 512>}]} {
    %c0 = arith.constant 0 : index
    %c0_0 = arith.constant 0 : index
    %0 = vector.load %arg2[%c0, %c0_0] : memref<8x512xf32, #tpu.memory_space<vmem>>, vector<8x512xf32>
    %c511_i32 = arith.constant 511 : i32
    %1 = tpu.dynamic_rotate %0 by %c511_i32 dim 1 : vector<8x512xf32>, i32 -> vector<8x512xf32>
    %c1_i32 = arith.constant 1 : i32
    %2 = tpu.dynamic_rotate %0 by %c1_i32 dim 1 : vector<8x512xf32>, i32 -> vector<8x512xf32>
    %c0_1 = arith.constant 0 : index
    %c0_2 = arith.constant 0 : index
    %3 = vector.load %arg3[%c0_1, %c0_2] : memref<1x512xf32, #tpu.memory_space<vmem>>, vector<1x512xf32>
    %4 = vector.broadcast %3 : vector<1x512xf32> to vector<8x512xf32>
    %5 = arith.mulf %0, %4 : vector<8x512xf32>
    %c0_3 = arith.constant 0 : index
    %c0_4 = arith.constant 0 : index
    %6 = vector.load %arg4[%c0_3, %c0_4] : memref<1x512xf32, #tpu.memory_space<vmem>>, vector<1x512xf32>
    %7 = vector.broadcast %6 : vector<1x512xf32> to vector<8x512xf32>
    %8 = arith.mulf %1, %7 : vector<8x512xf32>
    %9 = arith.addf %5, %8 : vector<8x512xf32>
    %c0_5 = arith.constant 0 : index
    %c0_6 = arith.constant 0 : index
    %10 = vector.load %arg5[%c0_5, %c0_6] : memref<1x512xf32, #tpu.memory_space<vmem>>, vector<1x512xf32>
    %11 = vector.broadcast %10 : vector<1x512xf32> to vector<8x512xf32>
    %12 = arith.mulf %2, %11 : vector<8x512xf32>
    %13 = arith.addf %9, %12 : vector<8x512xf32>
    %c0_7 = arith.constant 0 : index
    %c0_8 = arith.constant 0 : index
    %14 = vector.load %arg6[%c0_7, %c0_8] : memref<8x512xf32, #tpu.memory_space<vmem>>, vector<8x512xf32>
    tpu.vector_store %arg6[%c0_7, %c0_8], %13 {strides = array<i32>} : memref<8x512xf32, #tpu.memory_space<vmem>>, vector<8x512xf32>,
    return
  }
  func.func @transform_0(%arg0: i32, %arg1: i32) -> (i32, i32) {
    %c0_i32 = arith.constant 0 : i32
    return %arg0, %arg1 : i32, i32
  }
  func.func @transform_1(%arg0: i32, %arg1: i32) -> (i32, i32) {
    %c0_i32 = arith.constant 0 : i32
    %c0_i32_0 = arith.constant 0 : i32
    return %c0_i32, %arg1 : i32, i32
  }
  func.func @transform_2(%arg0: i32, %arg1: i32) -> (i32, i32) {
    %c0_i32 = arith.constant 0 : i32
    %c0_i32_0 = arith.constant 0 : i32
    return %c0_i32, %arg1 : i32, i32
  }
  func.func @transform_3(%arg0: i32, %arg1: i32) -> (i32, i32) {
    %c0_i32 = arith.constant 0 : i32
    %c0_i32_0 = arith.constant 0 : i32
    return %c0_i32, %arg1 : i32, i32
  }
  func.func @transform_4(%arg0: i32, %arg1: i32) -> (i32, i32) {
    %c0_i32 = arith.constant 0 : i32
    return %arg0, %arg1 : i32, i32
  }
}

</mosaic_0001>

<llo_original>
// kernel: tpu_custom_call.1
$region0: #{tpu_custom_call.1}
  #allocation0 [shape = 'u32[]', space=smem, size = 0x4, offset = 0x4, fixed_abs, tag = 'smem constant byte address 0x4 - core index']
  #allocation1 [shape = 'u32[144,128]{1,0:T(1,128)}', space=vmem, size = 0x12000, scoped, tag = 'internal scratch']
  %s0 = inlined_call_operand.hbm [shape: f32[16,512], index: 0, kind: input, shape index: {}]
  %s1 = inlined_call_operand.hbm [shape: f32[1,512], index: 1, kind: input, shape index: {}]
  %s2 = inlined_call_operand.vmem [shape: f32[1,512], index: 2, kind: input, shape index: {}]
  %s3 = inlined_call_operand.vmem [shape: f32[1,512], index: 3, kind: input, shape index: {}]
  %s4 = inlined_call_operand.hbm [shape: f32[16,512], index: 4, kind: output, shape index: {}]
  %s5 = sld [smem:[#allocation0]]
  $region57: #{tpu_custom_call.1} parent=0
    _
  %s7 = ssub.s32 1, %s5
  %s8 = scalar_select 0, %s7, %s5
  $region1: #{tpu_custom_call.1} parent=0
    #allocation2 [shape = 'u8[32768]{0}', space=vmem, size = 0x8000, scoped, tag = 'input window, operand 0']
    #allocation3 [shape = 's32[2]{0}', space=sflag, size = 0x8, scoped, tag = 'scoped memory for tpu_custom_call.1']
    #allocation4 [shape = 's32[2]{0}', space=sflag, size = 0x8, scoped, tag = 'scoped memory for tpu_custom_call.1']
    #allocation5 [shape = 'u8[2048]{0}', space=vmem, size = 0x800, scoped, tag = 'input window, operand 1, single buffered']
    #allocation6 [shape = 's32[1]{0}', space=sflag, size = 0x4, scoped, tag = 'scoped memory for tpu_custom_call.1']
    #allocation7 [shape = 'u8[32768]{0}', space=vmem, size = 0x8000, scoped, tag = 'output window, operand 0']
    %9 = vsyncpa [#allocation3], 0
    %s10 = scalar_lea.sflag [#allocation3], 1
    %11 = vsyncpa %s10, 0
    %12 = vsyncpa [#allocation6], 0
    %13 = vsyncpa [#allocation4], 0
    %s14 = scalar_lea.sflag [#allocation4], 1
    %15 = vsyncpa %s14, 0
    loop: start=0, step=1, limit=4
    $region2: #{tpu_custom_call.1} parent=1 // loop_pre_header
      _
    $region3: #{tpu_custom_call.1} parent=1 // loop_header
      %s17 = sphi 0, %s21
      %p18 = scmp.ge.s32.totalorder %s17, 4
      %s24 = sphi 0, %s36
      %s25 = sphi 0, %s32
      %s26 = sphi 0, %s24
      %s27 = sphi 0, %s25
      %s28 = sphi 0, %s26
      %s29 = sphi 0, %s27
      %s41 = sphi 0, %s43
      %s44 = sphi 0, %s41
      %s45 = sphi 0, %s44
      %s61 = sphi 0, %s45
      %s67 = sphi 0, %s69
      %s70 = sphi 0, %s67
      %s71 = sphi 0, %s70
      %s87 = sphi 0, %s71
      %s93 = sphi 0, %s95
      %s96 = sphi 0, %s93
      %s97 = sphi 0, %s96
      %s113 = sphi 0, %s97
      %s119 = sphi 0, %s121
      %s122 = sphi 0, %s119
      %s123 = sphi 0, %s122
      %s139 = sphi 0, %s123
      %s147 = sphi 0, %s149
      %s150 = sphi 0, %s147
      %s151 = sphi 0, %s150
      %s167 = sphi 0, %s151
    $region4: #{tpu_custom_call.1} parent=1 // loop_header_branch
      %20 = sbr.rel (%p18) target = $region8
    $region5: #{tpu_custom_call.1} parent=1 // loop_body
      %s22 = ssub.s32 %s17, 1
      %s23 = ssub.s32 %s17, 2
      %s30 = sadd.s32 1, %s25
      %p31 = scmp.ge.s32.totalorder %s30, 1
      %s32 = scalar_select %p31, 0, %s30
      %s33 = sadd.s32 1, %s24
      %s34 = scalar_select %p31, %s33, %s24
      %p35 = scmp.ge.s32.totalorder %s34, 2
      %s36 = scalar_select %p35, 0, %s34
      %s37 = ssub.s32 %s24, %s36
      %s38 = ssub.s32 %s25, %s32
      %s39 = sor.u32 %s37, %s38
      %p40 = scmp.eq.s32.totalorder %s39, 0
      %s42 = sadd.s32 %s41, 1
      %s43 = scalar_select %p40, %s41, %s42
      %p46 = pneg %p40
      %p47 = scmp.eq.s32.totalorder %s17, 1
      %p48 = por %p46, %p47
      %p49 = scmp.ne.s32.totalorder %s41, %s44
      %p50 = scmp.eq.s32.totalorder %s17, 0
      %p51 = por %p49, %p50
      %p52 = scmp.ne.s32.totalorder %s41, %s44
      %p53 = scmp.eq.s32.totalorder %s22, 1
      %p54 = por %p52, %p53
      %p55 = scmp.ne.s32.totalorder %s44, %s45
      %p56 = scmp.eq.s32.totalorder %s22, 0
      %p57 = por %p55, %p56
      %p58 = scmp.ne.s32.totalorder %s44, %s45
      %p59 = scmp.eq.s32.totalorder %s23, 1
      %p60 = por %p58, %p59
      %p62 = scmp.ne.s32.totalorder %s45, %s61
      %p63 = scmp.eq.s32.totalorder %s23, 0
      %p64 = por %p62, %p63
      %s65 = ssub.s32 %s25, %s32
      %p66 = scmp.eq.s32.totalorder %s65, 0
      %s68 = sadd.s32 %s67, 1
      %s69 = scalar_select %p66, %s67, %s68
      %p72 = pneg %p66
      %p73 = scmp.eq.s32.totalorder %s17, 1
      %p74 = por %p72, %p73
      %p75 = scmp.ne.s32.totalorder %s67, %s70
      %p76 = scmp.eq.s32.totalorder %s17, 0
      %p77 = por %p75, %p76
      %p78 = scmp.ne.s32.totalorder %s67, %s70
      %p79 = scmp.eq.s32.totalorder %s22, 1
      %p80 = por %p78, %p79
      %p81 = scmp.ne.s32.totalorder %s70, %s71
      %p82 = scmp.eq.s32.totalorder %s22, 0
      %p83 = por %p81, %p82
      %p84 = scmp.ne.s32.totalorder %s70, %s71
      %p85 = scmp.eq.s32.totalorder %s23, 1
      %p86 = por %p84, %p85
      %p88 = scmp.ne.s32.totalorder %s71, %s87
      %p89 = scmp.eq.s32.totalorder %s23, 0
      %p90 = por %p88, %p89
      %s91 = ssub.s32 %s25, %s32
      %p92 = scmp.eq.s32.totalorder %s91, 0
      %s94 = sadd.s32 %s93, 1
      %s95 = scalar_select %p92, %s93, %s94
      %p98 = pneg %p92
      %p99 = scmp.eq.s32.totalorder %s17, 1
      %p100 = por %p98, %p99
      %p101 = scmp.ne.s32.totalorder %s93, %s96
      %p102 = scmp.eq.s32.totalorder %s17, 0
      %p103 = por %p101, %p102
      %p104 = scmp.ne.s32.totalorder %s93, %s96
      %p105 = scmp.eq.s32.totalorder %s22, 1
      %p106 = por %p104, %p105
      %p107 = scmp.ne.s32.totalorder %s96, %s97
      %p108 = scmp.eq.s32.totalorder %s22, 0
      %p109 = por %p107, %p108
      %p110 = scmp.ne.s32.totalorder %s96, %s97
      %p111 = scmp.eq.s32.totalorder %s23, 1
      %p112 = por %p110, %p111
      %p114 = scmp.ne.s32.totalorder %s97, %s113
      %p115 = scmp.eq.s32.totalorder %s23, 0
      %p116 = por %p114, %p115
      %s117 = ssub.s32 %s25, %s32
      %p118 = scmp.eq.s32.totalorder %s117, 0
      %s120 = sadd.s32 %s119, 1
      %s121 = scalar_select %p118, %s119, %s120
      %p124 = pneg %p118
      %p125 = scmp.eq.s32.totalorder %s17, 1
      %p126 = por %p124, %p125
      %p127 = scmp.ne.s32.totalorder %s119, %s122
      %p128 = scmp.eq.s32.totalorder %s17, 0
      %p129 = por %p127, %p128
      %p130 = scmp.ne.s32.totalorder %s119, %s122
      %p131 = scmp.eq.s32.totalorder %s22, 1
      %p132 = por %p130, %p131
      %p133 = scmp.ne.s32.totalorder %s122, %s123
      %p134 = scmp.eq.s32.totalorder %s22, 0
      %p135 = por %p133, %p134
      %p136 = scmp.ne.s32.totalorder %s122, %s123
      %p137 = scmp.eq.s32.totalorder %s23, 1
      %p138 = por %p136, %p137
      %p140 = scmp.ne.s32.totalorder %s123, %s139
      %p141 = scmp.eq.s32.totalorder %s23, 0
      %p142 = por %p140, %p141
      %s143 = ssub.s32 %s24, %s36
      %s144 = ssub.s32 %s25, %s32
      %s145 = sor.u32 %s143, %s144
      %p146 = scmp.eq.s32.totalorder %s145, 0
      %s148 = sadd.s32 %s147, 1
      %s149 = scalar_select %p146, %s147, %s148
      %p152 = pneg %p146
      %p153 = scmp.eq.s32.totalorder %s17, 1
      %p154 = por %p152, %p153
      %p155 = scmp.ne.s32.totalorder %s147, %s150
      %p156 = scmp.eq.s32.totalorder %s17, 0
      %p157 = por %p155, %p156
      %p158 = scmp.ne.s32.totalorder %s147, %s150
      %p159 = scmp.eq.s32.totalorder %s22, 1
      %p160 = por %p158, %p159
      %p161 = scmp.ne.s32.totalorder %s150, %s151
      %p162 = scmp.eq.s32.totalorder %s22, 0
      %p163 = por %p161, %p162
      %p164 = scmp.ne.s32.totalorder %s150, %s151
      %p165 = scmp.eq.s32.totalorder %s23, 1
      %p166 = por %p164, %p165
      %p168 = scmp.ne.s32.totalorder %s151, %s167
      %p169 = scmp.eq.s32.totalorder %s23, 0
      %p170 = por %p168, %p169
      %p171 = scmp.le.s32.totalorder 1, %s17
      %p172 = scmp.lt.s32.totalorder %s17, 3
      %p173 = pnand %p171, %p172
      %p174 = pneg %p173
      // Predicated region
      $region9: #{tpu_custom_call.1} parent=5 // pred_check
        _
      $region10: #{tpu_custom_call.1} parent=5 // pred_check_branch
        %176 = sbr.rel (%p173) target = $region12
      $region11: #{tpu_custom_call.1} parent=5 // pred_region
        %s177 = ssub.s32 %s17, 1
        // Predicated region
        $region13: #{tpu_custom_call.1} parent=11 // pred_check
          %p178 = pneg %p83
        $region14: #{tpu_custom_call.1} parent=11 // pred_check_branch
          %180 = sbr.rel (%p178) target = $region16
        $region15: #{tpu_custom_call.1} parent=11 // pred_region
          %s181 = smul.u32 4, %s27
          %s183 = ssub.s32 64, 64
          %184 = vsyncadd [#allocation6], %s183
          %s185 = smul.addr %s181, 16
          %s186 = scalar_lea.hbm %s1, %s185
          %s188 = sshll.u32 [#allocation5], 4
          %s189 = int_to_ptr.vmem [resolvable:$true] %s188
          %191 = dma.hbm_to_vmem [thread:$0]  %s186, 64, %s189, [#allocation6]
        $region16: #{tpu_custom_call.1} parent=11 // pred_fallthru
          _
        // Predicated region
        $region17: #{tpu_custom_call.1} parent=11 // pred_check
          %p192 = pneg %p109
        $region18: #{tpu_custom_call.1} parent=11 // pred_check_branch
          %194 = sbr.rel (%p192) target = $region20
        $region19: #{tpu_custom_call.1} parent=11 // pred_region
          %s195 = smul.u32 4, %s27
          %p196 = scmp.lt.s32.totalorder %s195, 3
          %s197 = scalar_select %p196, %s195, 3
          %s198 = scalar_lea.vmem %s2, %s197
          %s199 = smul.u32 4, %s27
        $region20: #{tpu_custom_call.1} parent=11 // pred_fallthru
          _
        // Predicated region
        $region21: #{tpu_custom_call.1} parent=11 // pred_check
          %p200 = pneg %p135
        $region22: #{tpu_custom_call.1} parent=11 // pred_check_branch
          %202 = sbr.rel (%p200) target = $region24
        $region23: #{tpu_custom_call.1} parent=11 // pred_region
          %s203 = smul.u32 4, %s27
          %p204 = scmp.lt.s32.totalorder %s203, 3
          %s205 = scalar_select %p204, %s203, 3
          %s206 = scalar_lea.vmem %s3, %s205
          %s207 = smul.u32 4, %s27
        $region24: #{tpu_custom_call.1} parent=11 // pred_fallthru
          _
      $region12: #{tpu_custom_call.1} parent=5 // pred_fallthru
        _
      %p208 = scmp.lt.s32.totalorder %s17, 2
      // Predicated region
      $region25: #{tpu_custom_call.1} parent=5 // pred_check
        %p209 = pneg %p208
      $region26: #{tpu_custom_call.1} parent=5 // pred_check_branch
        %211 = sbr.rel (%p209) target = $region28
      $region27: #{tpu_custom_call.1} parent=5 // pred_region
        // Predicated region
        $region29: #{tpu_custom_call.1} parent=27 // pred_check
          %p212 = pneg %p51
        $region30: #{tpu_custom_call.1} parent=27 // pred_check_branch
          %214 = sbr.rel (%p212) target = $region32
        $region31: #{tpu_custom_call.1} parent=27 // pred_region
          %s215 = sand.u32 %s41, 1
          %s216 = scalar_lea.sflag [#allocation3], %s215
          %s217 = sand.u32 %s41, 1
          %s218 = smul.addr %s217, 32
          %s219 = scalar_lea.vmem [#allocation2], %s218
          %s220 = smul.u32 4, %s25
          %s222 = ssub.s32 512, 512
          %223 = vsyncadd %s216, %s222
          %s224 = smul.addr %s24, 4
          %s225 = sadd.s32 %s220, %s224
          %s226 = smul.addr %s225, 128
          %s227 = scalar_lea.hbm %s0, %s226
          %s229 = sshll.u32 %s219, 4
          %s230 = int_to_ptr.vmem [resolvable:$true] %s229
          %232 = dma.hbm_to_vmem [thread:$0]  %s227, 512, %s230, %s216
        $region32: #{tpu_custom_call.1} parent=27 // pred_fallthru
          _
      $region28: #{tpu_custom_call.1} parent=5 // pred_fallthru
        _
      %p233 = scmp.le.s32.totalorder 1, %s17
      %p234 = scmp.lt.s32.totalorder %s17, 3
      %p235 = pnand %p233, %p234
      %p236 = pneg %p235
      // Predicated region
      $region33: #{tpu_custom_call.1} parent=5 // pred_check
        _
      $region34: #{tpu_custom_call.1} parent=5 // pred_check_branch
        %238 = sbr.rel (%p235) target = $region36
      $region35: #{tpu_custom_call.1} parent=5 // pred_region
        %s239 = ssub.s32 %s17, 1
        %s240 = sand.u32 %s44, 1
        %s241 = scalar_lea.sflag [#allocation3], %s240
        %s242 = sand.u32 %s44, 1
        %s243 = smul.addr %s242, 32
        %s244 = scalar_lea.vmem [#allocation2], %s243
        // Predicated region
        $region37: #{tpu_custom_call.1} parent=35 // pred_check
          %p245 = pneg %p57
        $region38: #{tpu_custom_call.1} parent=35 // pred_check_branch
          %247 = sbr.rel (%p245) target = $region40
        $region39: #{tpu_custom_call.1} parent=35 // pred_region
          %248 = dma.done %s241, 512
        $region40: #{tpu_custom_call.1} parent=35 // pred_fallthru
          _
        // Predicated region
        $region41: #{tpu_custom_call.1} parent=35 // pred_check
          %p249 = pneg %p83
        $region42: #{tpu_custom_call.1} parent=35 // pred_check_branch
          %251 = sbr.rel (%p249) target = $region44
        $region43: #{tpu_custom_call.1} parent=35 // pred_region
          %252 = dma.done [#allocation6], 64
        $region44: #{tpu_custom_call.1} parent=35 // pred_fallthru
          _
        %s253 = sand.u32 %s44, 1
        %s254 = scalar_lea.sflag [#allocation3], %s253
        %s255 = sand.u32 %s44, 1
        %s256 = smul.addr %s255, 32
        %s257 = scalar_lea.vmem [#allocation2], %s256
        %p258 = pneg %p57
        %p259 = pneg %p54
        %p260 = pneg %p83
        %p261 = pneg %p80
        %s262 = smul.u32 4, %s27
        %p263 = scmp.lt.s32.totalorder %s262, 3
        %s264 = scalar_select %p263, %s262, 3
        %s265 = scalar_lea.vmem %s2, %s264
        %p266 = pneg %p109
        %p267 = pneg %p106
        %s268 = smul.u32 4, %s27
        %p269 = scmp.lt.s32.totalorder %s268, 3
        %s270 = scalar_select %p269, %s268, 3
        %s271 = scalar_lea.vmem %s3, %s270
        %p272 = pneg %p135
        %p273 = pneg %p132
        %p274 = pneg %p163
        %p275 = pneg %p160
        %s276 = sand.u32 %s150, 1
        %s277 = scalar_lea.sflag [#allocation4], %s276
        %s278 = sand.u32 %s150, 1
        %s279 = smul.addr %s278, 32
        %s280 = scalar_lea.vmem [#allocation7], %s279
        %s281 = smul.u32 4, %s27
        %s282 = smul.u32 4, %s27
        %s283 = smul.u32 4, %s27
        %p284 = scmp.lt.s32.totalorder %s283, 3
        %s285 = scalar_select %p284, %s283, 3
        %s286 = scalar_lea.vmem %s2, %s285
        %s287 = smul.u32 4, %s27
        %s288 = smul.u32 4, %s27
        %p289 = scmp.lt.s32.totalorder %s288, 3
        %s290 = scalar_select %p289, %s288, 3
        %s291 = scalar_lea.vmem %s3, %s290
        %s292 = smul.u32 4, %s27
        %s293 = smul.u32 4, %s27
        %v294 = vld [vmem:[%s244] sm:$0xff]
        %v295 = vld [vmem:[%s244 + $0x8] sm:$0xff]
        %v296 = vld [vmem:[%s244 + $0x10] sm:$0xff]
        %v297 = vld [vmem:[%s244 + $0x18] sm:$0xff]
        %298 = vrot.lane.b32.xlu0 %v294, 127
        %v299 = vpop.permute.xlu0 %298
        %300 = vrot.lane.b32.xlu0 %v295, 127
        %v301 = vpop.permute.xlu0 %300
        %302 = vrot.lane.b32.xlu0 %v296, 127
        %v303 = vpop.permute.xlu0 %302
        %304 = vrot.lane.b32.xlu0 %v297, 127
        %v305 = vpop.permute.xlu0 %304
        %v306 = vlaneseq
        %v307 = vand.u32 %v306, 127
        %vm308 = vcmp.lt.s32.totalorder %v307, 127
        %v309 = vsel %vm308, %v303, %v305
        %v310 = vsel %vm308, %v301, %v303
        %v311 = vsel %vm308, %v299, %v301
        %v312 = vsel %vm308, %v305, %v299
        %313 = vrot.lane.b32.xlu0 %v294, 1
        %v314 = vpop.permute.xlu0 %313
        %315 = vrot.lane.b32.xlu0 %v295, 1
        %v316 = vpop.permute.xlu0 %315
        %317 = vrot.lane.b32.xlu0 %v296, 1
        %v318 = vpop.permute.xlu0 %317
        %319 = vrot.lane.b32.xlu0 %v297, 1
        %v320 = vpop.permute.xlu0 %319
        %vm321 = vcmp.lt.s32.totalorder %v307, 1
        %v322 = vsel %vm321, %v318, %v320
        %v323 = vsel %vm321, %v316, %v318
        %v324 = vsel %vm321, %v314, %v316
        %v325 = vsel %vm321, %v320, %v314
        %v326 = vld [vmem:[#allocation5] sm:$0xf]
        %v328 = vlaneseq
        %v329 = vshrl.u32 %v328, 7
        %v330 = vsub.s32 0, %v329
        %v331 = vrot.slane %v326, %v330
        %v332 = vlaneseq
        %v333 = vshrl.u32 %v332, 7
        %v334 = vsub.s32 1, %v333
        %v335 = vrot.slane %v326, %v334
        %v336 = vlaneseq
        %v337 = vshrl.u32 %v336, 7
        %v338 = vsub.s32 2, %v337
        %v339 = vrot.slane %v326, %v338
        %v340 = vlaneseq
        %v341 = vshrl.u32 %v340, 7
        %v342 = vsub.s32 3, %v341
        %v343 = vrot.slane %v326, %v342
        %v348 = vmul.f32 %v294, %v331
        %v349 = vmul.f32 %v295, %v335
        %v350 = vmul.f32 %v296, %v339
        %v351 = vmul.f32 %v297, %v343
        %v352 = vld [vmem:[%s286] sm:$0xf]
        %v354 = vlaneseq
        %v355 = vshrl.u32 %v354, 7
        %v356 = vsub.s32 0, %v355
        %v357 = vrot.slane %v352, %v356
        %v358 = vlaneseq
        %v359 = vshrl.u32 %v358, 7
        %v360 = vsub.s32 1, %v359
        %v361 = vrot.slane %v352, %v360
        %v362 = vlaneseq
        %v363 = vshrl.u32 %v362, 7
        %v364 = vsub.s32 2, %v363
        %v365 = vrot.slane %v352, %v364
        %v366 = vlaneseq
        %v367 = vshrl.u32 %v366, 7
        %v368 = vsub.s32 3, %v367
        %v369 = vrot.slane %v352, %v368
        %v374 = vmul.f32 %v311, %v357
        %v375 = vmul.f32 %v310, %v361
        %v376 = vmul.f32 %v309, %v365
        %v377 = vmul.f32 %v312, %v369
        %v378 = vadd.f32 %v348, %v374
        %v379 = vadd.f32 %v349, %v375
        %v380 = vadd.f32 %v350, %v376
        %v381 = vadd.f32 %v351, %v377
        %v382 = vld [vmem:[%s291] sm:$0xf]
        %v384 = vlaneseq
        %v385 = vshrl.u32 %v384, 7
        %v386 = vsub.s32 0, %v385
        %v387 = vrot.slane %v382, %v386
        %v388 = vlaneseq
        %v389 = vshrl.u32 %v388, 7
        %v390 = vsub.s32 1, %v389
        %v391 = vrot.slane %v382, %v390
        %v392 = vlaneseq
        %v393 = vshrl.u32 %v392, 7
        %v394 = vsub.s32 2, %v393
        %v395 = vrot.slane %v382, %v394
        %v396 = vlaneseq
        %v397 = vshrl.u32 %v396, 7
        %v398 = vsub.s32 3, %v397
        %v399 = vrot.slane %v382, %v398
        %v404 = vmul.f32 %v325, %v387
        %v405 = vmul.f32 %v324, %v391
        %v406 = vmul.f32 %v323, %v395
        %v407 = vmul.f32 %v322, %v399
        %v408 = vadd.f32 %v378, %v404
        %v409 = vadd.f32 %v379, %v405
        %v410 = vadd.f32 %v380, %v406
        %v411 = vadd.f32 %v381, %v407
        %412 = vst [vmem:[%s280] sm:$0xff] %v408
        %413 = vst [vmem:[%s280 + $0x8] sm:$0xff] %v409
        %414 = vst [vmem:[%s280 + $0x10] sm:$0xff] %v410
        %415 = vst [vmem:[%s280 + $0x18] sm:$0xff] %v411
        %s416 = sand.u32 %s150, 1
        %s417 = scalar_lea.sflag [#allocation4], %s416
        %s418 = sand.u32 %s150, 1
        %s419 = smul.addr %s418, 32
        %s420 = scalar_lea.vmem [#allocation7], %s419
        // Predicated region
        $region45: #{tpu_custom_call.1} parent=35 // pred_check
          %p421 = pneg %p160
        $region46: #{tpu_custom_call.1} parent=35 // pred_check_branch
          %423 = sbr.rel (%p421) target = $region48
        $region47: #{tpu_custom_call.1} parent=35 // pred_region
          %s424 = smul.u32 4, %s27
          %s426 = ssub.s32 512, 512
          %427 = vsyncadd %s417, %s426
          %s428 = smul.addr %s26, 4
          %s429 = sadd.s32 %s424, %s428
          %s430 = smul.addr %s429, 128
          %s431 = scalar_lea.hbm %s4, %s430
          %s433 = sshll.u32 %s420, 4
          %s434 = int_to_ptr.vmem [resolvable:$true] %s433
          %436 = dma.vmem_to_hbm [thread:$0]  %s434, 512, %s431, %s417
        $region48: #{tpu_custom_call.1} parent=35 // pred_fallthru
          _
      $region36: #{tpu_custom_call.1} parent=5 // pred_fallthru
        _
      %p437 = scmp.le.s32.totalorder 2, %s17
      // Predicated region
      $region49: #{tpu_custom_call.1} parent=5 // pred_check
        %p438 = pneg %p437
      $region50: #{tpu_custom_call.1} parent=5 // pred_check_branch
        %440 = sbr.rel (%p438) target = $region52
      $region51: #{tpu_custom_call.1} parent=5 // pred_region
        %s441 = ssub.s32 %s17, 2
        // Predicated region
        $region53: #{tpu_custom_call.1} parent=51 // pred_check
          %p442 = pneg %p166
        $region54: #{tpu_custom_call.1} parent=51 // pred_check_branch
          %444 = sbr.rel (%p442) target = $region56
        $region55: #{tpu_custom_call.1} parent=51 // pred_region
          %s445 = sand.u32 %s151, 1
          %s446 = scalar_lea.sflag [#allocation4], %s445
          %s447 = sand.u32 %s151, 1
          %s448 = smul.addr %s447, 32
          %s449 = scalar_lea.vmem [#allocation7], %s448
          %450 = dma.done %s446, 512
        $region56: #{tpu_custom_call.1} parent=51 // pred_fallthru
          _
      $region52: #{tpu_custom_call.1} parent=5 // pred_fallthru
        _
    $region6: #{tpu_custom_call.1} parent=1 // loop_footer
      %s21 = sadd.s32 1, %s17
    $region7: #{tpu_custom_call.1} parent=1 // loop_footer_branch
      %16 = sbr.rel target = $region3
    $region8: #{tpu_custom_call.1} parent=1 // loop_exit
      _
    %451 = vsyncpa [#allocation3], 1
    %s452 = scalar_lea.sflag [#allocation3], 1
    %453 = vsyncpa %s452, 1
    %454 = vsyncpa [#allocation6], 1
    %455 = vsyncpa [#allocation4], 1
    %s456 = scalar_lea.sflag [#allocation4], 1
    %457 = vsyncpa %s456, 1

</llo_original>
